<compile_context>
chip_gen: v7x
topology: tpu7x:2x2x1
jax: 0.10.0
libtpu: 0.0.40
codegen_flags: <defaults>
</compile_context>

<pallas_src>
import functools

import jax
import jax.numpy as jnp
from jax.experimental import pallas as pl
from jax.experimental.pallas import tpu as pltpu

BN_EPS = 1e-3  # nn.BatchNorm1d(..., eps=0.001)
_LANE = 128
_BF16_SUBLANE = 16


def _round_up(x, m):
    return ((x + m - 1) // m) * m


# --------------------------------------------------------------------------- #
# Kernel
# --------------------------------------------------------------------------- #
def _fused_stack_kernel(has_cat, *refs):
    """One grid step == one FCLayers block: Linear -> BN (batch stats) -> ReLU.

    o_ref's block index is constant across the grid, so it is the VMEM-resident
    (bf16) activation carried layer-to-layer; HBM writeback happens once at end.
    Layer 0 reads the padded input x (its own K width); layers >= 1 read o_ref.
    """
    if has_cat:
        x_ref, oh_ref, w0_ref, wh_ref, wc_ref, bnp_ref, o_ref = refs
    else:
        x_ref, w0_ref, wh_ref, bnp_ref, o_ref = refs
        oh_ref = wc_ref = None

    l = pl.program_id(0)

    gamma = bnp_ref[0:1, :]   # (1, d_res) f32 (zero on padded lanes)
    beta = bnp_ref[1:2, :]    # (1, d_res) f32 (zero on padded lanes)

    def _layer(a_bf16, w_bf16):
        # Linear (bias dropped -- cancelled by training-mode BN mean subtraction).
        h = jnp.dot(a_bf16, w_bf16, preferred_element_type=jnp.float32)
        if has_cat:
            h = h + jnp.dot(oh_ref[...], wc_ref[...],
                            preferred_element_type=jnp.float32)
        # BatchNorm1d (training mode): batch mean + biased batch variance.
        mean = jnp.mean(h, axis=0, keepdims=True)
        cent = h - mean
        var = jnp.mean(cent * cent, axis=0, keepdims=True)
        scale = jax.lax.rsqrt(var + BN_EPS) * gamma          # gamma folded in
        y = cent * scale + beta
        # ReLU; Dropout is identity in eval mode.
        o_ref[...] = jnp.maximum(y, 0.0).astype(o_ref.dtype)

    @pl.when(l == 0)
    def _():
        _layer(x_ref[...], w0_ref[...])

    @pl.when(l > 0)
    def _():
        _layer(o_ref[...], wh_ref[...])


# --------------------------------------------------------------------------- #
# Parameter init + one-time packing
# --------------------------------------------------------------------------- #
def init_fc_layers_params(key, n_in, n_out, n_cat_list, n_layers, n_hidden):
    """Parameter init mirroring FCLayers.__init__ shapes; W stored (fan_in, d_out)."""
    n_cat_list = [c if c > 1 else 0 for c in (n_cat_list or [])]
    cat_dim = sum(n_cat_list)
    layers_dim = [n_in] + (n_layers - 1) * [n_hidden] + [n_out]
    params = []
    for d_in, d_out in zip(layers_dim[:-1], layers_dim[1:]):
        key, kw, kb = jax.random.split(key, 3)
        fan_in = d_in + cat_dim
        bound = 1.0 / (fan_in ** 0.5)
        w = jax.random.uniform(kw, (fan_in, d_out), jnp.float32, -bound, bound)
        b = jax.random.uniform(kb, (1, d_out), jnp.float32, -bound, bound)
        gamma = jnp.ones((1, d_out), jnp.float32)
        beta = jnp.zeros((1, d_out), jnp.float32)
        params.append((w, b, gamma, beta))
    return params, n_cat_list


def pack_fc_layers_params(params, n_cat_list):
    """One-time pack: pad + cast weights to bf16 slabs ready for the kernel.

    Runs once at init (not per forward) so no weight re-materialization in HBM
    per call. Bias is intentionally dropped (cancelled by training-mode BN).
    """
    cat_dim = sum(n_cat_list)
    L = len(params)
    d_ins = [w.shape[0] - cat_dim for (w, _, _, _) in params]
    d_outs = [w.shape[1] for (w, _, _, _) in params]

    d_in0_pad = _round_up(d_ins[0], _LANE)                       # layer-0 K width
    d_res = _round_up(max(d_outs + d_ins[1:]), _LANE)            # resident act width
    c_pad = _round_up(cat_dim, _BF16_SUBLANE) if cat_dim > 0 else 0

    # Layer 0 main weight: its own (possibly much larger) input width.
    w0 = jnp.zeros((d_in0_pad, d_res), jnp.bfloat16)
    w0 = w0.at[: d_ins[0], : d_outs[0]].set(
        params[0][0][: d_ins[0]].astype(jnp.bfloat16))

    # Layers 1..L-1 main weights: stacked at (d_res, d_res).
    wh_list = []
    for (w, _, _, _), d_in, d_out in zip(params[1:], d_ins[1:], d_outs[1:]):
        wpad = jnp.zeros((d_res, d_res), jnp.bfloat16)
        wpad = wpad.at[:d_in, :d_out].set(w[:d_in].astype(jnp.bfloat16))
        wh_list.append(wpad)
    if wh_list:
        wh = jnp.stack(wh_list)                                  # (L-1, d_res, d_res)
    else:
        wh = jnp.zeros((1, d_res, d_res), jnp.bfloat16)          # dummy (L == 1)

    # Covariate weights: same small K (c_pad) for every layer -> one stack.
    wc = None
    if cat_dim > 0:
        wc_list = []
        for (w, _, _, _), d_in, d_out in zip(params, d_ins, d_outs):
            wcpad = jnp.zeros((c_pad, d_res), jnp.bfloat16)
            wcpad = wcpad.at[:cat_dim, :d_out].set(w[d_in:].astype(jnp.bfloat16))
            wc_list.append(wcpad)
        wc = jnp.stack(wc_list)                                  # (L, c_pad, d_res)

    # BN params: gamma / beta only (bias dropped). Padded lanes are zero so the
    # padded activation columns stay exactly 0 through every layer.
    bnp_list = []
    for (_, _, gamma, beta), d_out in zip(params, d_outs):
        bnp = jnp.zeros((2, d_res), jnp.float32)
        bnp = bnp.at[0, :d_out].set(gamma[0]).at[1, :d_out].set(beta[0])
        bnp_list.append(bnp)
    bnp_all = jnp.stack(bnp_list)                                # (L, 2, d_res)

    meta = dict(L=L, cat_dim=cat_dim, c_pad=c_pad, d_ins=d_ins, d_outs=d_outs,
                d_in0_pad=d_in0_pad, d_res=d_res)
    return dict(w0=w0, wh=wh, wc=wc, bnp=bnp_all, meta=meta)


# --------------------------------------------------------------------------- #
# Forward
# --------------------------------------------------------------------------- #
def fc_layers_forward(packed, n_cat_list, x, *cat_list):
    """Fused Pallas forward of FCLayers. x: (B, n_in) f32; cat_list: int (B,)."""
    meta = packed["meta"]
    L = meta["L"]
    cat_dim = meta["cat_dim"]
    c_pad = meta["c_pad"]
    d_in0_pad = meta["d_in0_pad"]
    d_res = meta["d_res"]
    d_ins, d_outs = meta["d_ins"], meta["d_outs"]
    has_cat = cat_dim > 0

    B = x.shape[0]
    assert x.shape[1] == d_ins[0]

    # ---- per-call glue (cheap): pad + cast the activations only.
    x_pad = jnp.zeros((B, d_in0_pad), jnp.bfloat16)
    x_pad = x_pad.at[:, : d_ins[0]].set(x.astype(jnp.bfloat16))

    operands = [x_pad]
    in_specs = [pl.BlockSpec((B, d_in0_pad), lambda l: (0, 0))]

    oh_pad = None
    if has_cat:
        one_hots = [jax.nn.one_hot(cat, n_cat, dtype=jnp.bfloat16)
                    for n_cat, cat in zip(n_cat_list, cat_list) if n_cat > 1]
        oh = jnp.concatenate(one_hots, axis=-1)
        oh_pad = jnp.zeros((B, c_pad), jnp.bfloat16).at[:, :cat_dim].set(oh)
        operands.append(oh_pad)
        in_specs.append(pl.BlockSpec((B, c_pad), lambda l: (0, 0)))

    operands.append(packed["w0"])
    in_specs.append(pl.BlockSpec((d_in0_pad, d_res), lambda l: (0, 0)))

    # Stacked hidden/output weights: block 0 is also prefetched during layer 0
    # (it is exactly layer 1's weight), so the max() clamp doubles as prefetch.
    operands.append(packed["wh"])
    in_specs.append(pl.BlockSpec((pl.Squeezed(), d_res, d_res),
                                 lambda l: (jnp.maximum(l - 1, 0), 0, 0)))
    if has_cat:
        operands.append(packed["wc"])
        in_specs.append(pl.BlockSpec((pl.Squeezed(), c_pad, d_res),
                                     lambda l: (l, 0, 0)))
    operands.append(packed["bnp"])
    in_specs.append(pl.BlockSpec((pl.Squeezed(), 2, d_res), lambda l: (l, 0, 0)))

    # ---- cost estimate (advisory).
    flops = sum(2 * B * (di + cat_dim) * do for di, do in zip(d_ins, d_outs))
    bytes_accessed = (x_pad.size * 2
                      + (oh_pad.size * 2 if has_cat else 0)
                      + packed["w0"].size * 2
                      + packed["wh"].size * 2
                      + (packed["wc"].size * 2 if has_cat else 0)
                      + packed["bnp"].size * 4
                      + B * d_res * 2)
    cost = pl.CostEstimate(flops=flops, transcendentals=L * d_res,
                           bytes_accessed=bytes_accessed)

    # ---- VMEM budget: resident bf16 activation + constant inputs + double-
    # buffered per-layer weight blocks; cap at 85% of this generation's VMEM.
    vmem_need = (2 * B * d_res * 2
                 + 2 * B * d_in0_pad * 2
                 + (2 * B * c_pad * 2 if has_cat else 0)
                 + 2 * d_in0_pad * d_res * 2
                 + 2 * d_res * d_res * 2
                 + (2 * c_pad * d_res * 2 if has_cat else 0)
                 + 2 * 2 * d_res * 4)
    try:
        vmem_cap = int(getattr(pltpu.get_tpu_info(), "vmem_capacity_bytes",
                               64 * 1024 * 1024))
    except Exception:  # pragma: no cover - conservative fallback
        vmem_cap = 64 * 1024 * 1024
    vmem_limit = int(min(int(0.85 * vmem_cap),
                         max(32 * 1024 * 1024, 2 * vmem_need)))

    out_pad = pl.pallas_call(
        functools.partial(_fused_stack_kernel, has_cat),
        out_shape=jax.ShapeDtypeStruct((B, d_res), jnp.bfloat16),
        grid_spec=pltpu.PrefetchScalarGridSpec(
            num_scalar_prefetch=0,
            grid=(L,),
            in_specs=in_specs,
            out_specs=pl.BlockSpec((B, d_res), lambda l: (0, 0)),
        ),
        compiler_params=pltpu.CompilerParams(
            dimension_semantics=("arbitrary",),   # layers are sequential
            vmem_limit_bytes=vmem_limit,
        ),
        cost_estimate=cost,
    )(*operands)
    return out_pad[:, : d_outs[-1]].astype(jnp.float32)


# --------------------------------------------------------------------------- #
# Pure-JAX reference (f32, concat + bias, exact module semantics)
# --------------------------------------------------------------------------- #
def fc_layers_forward_ref(params, n_cat_list, x, *cat_list):
    one_hots = []
    for n_cat, cat in zip(n_cat_list, cat_list):
        if n_cat > 1:
            one_hots.append(jax.nn.one_hot(cat, n_cat, dtype=jnp.float32))
    for (w, b, gamma, beta) in params:
        x_cat = jnp.concatenate([x] + one_hots, axis=-1) if one_hots else x
        h = x_cat @ w + b
        mean = jnp.mean(h, axis=0, keepdims=True)
        var = jnp.mean((h - mean) ** 2, axis=0, keepdims=True)
        y = (h - mean) / jnp.sqrt(var + BN_EPS) * gamma + beta
        x = jnp.maximum(y, 0.0)
    return x


if __name__ == "__main__":
    B, N_IN, N_HIDDEN, N_OUT = 8, 16, 32, 12
    N_CAT_LIST = [3]
    N_LAYERS = 2

    key = jax.random.PRNGKey(0)
    k_params, k_x, k_cat = jax.random.split(key, 3)

    params, n_cat_list = init_fc_layers_params(
        k_params, N_IN, N_OUT, N_CAT_LIST, N_LAYERS, N_HIDDEN
    )
    packed = pack_fc_layers_params(params, n_cat_list)   # one-time pack

    x = jax.random.normal(k_x, (B, N_IN), dtype=jnp.float32)
    cat = jax.random.randint(k_cat, (B,), 0, N_CAT_LIST[0])

    out = fc_layers_forward(packed, n_cat_list, x, cat)
    out = jax.block_until_ready(out)

    ref = fc_layers_forward_ref(params, n_cat_list, x, cat)
    assert out.shape == (B, N_OUT), out.shape
    max_err = float(jnp.max(jnp.abs(out - ref)))
    # bf16 matmul inputs / bf16 resident activation (f32 accumulate + f32 BN)
    # -> slightly looser tolerance vs the f32 reference.
    assert jnp.allclose(out, ref, atol=5e-2, rtol=5e-2), max_err

    print("KERNEL_OK")
</pallas_src>

<mosaic_0001>
module attributes {stable_mosaic.version = 11 : i64} {
  func.func @_fused_stack_kernel(%arg0: i32, %arg1: memref<8x128xbf16, #tpu.memory_space<vmem>>, %arg2: memref<8x16xbf16, #tpu.memory_space<vmem>>, %arg3: memref<128x128xbf16, #tpu.memory_space<vmem>>, %arg4: memref<1x128x128xbf16, #tpu.memory_space<vmem>>, %arg5: memref<1x16x128xbf16, #tpu.memory_space<vmem>>, %arg6: memref<1x2x128xf32, #tpu.memory_space<vmem>>, %arg7: memref<8x128xbf16, #tpu.memory_space<vmem>>) attributes {dimension_semantics = [#tpu.dimension_semantics<arbitrary>], iteration_bounds = array<i64: 2>, scalar_prefetch = 0 : i64, scratch_operands = 0 : i64, tpu.core_type = #tpu.core_type<tc>, window_params = [{pipeline_mode = #tpu.pipeline_mode<synchronous>, transform_indices = @transform_0, window_bounds = array<i64: 8, 128>}, {pipeline_mode = #tpu.pipeline_mode<synchronous>, transform_indices = @transform_1, window_bounds = array<i64: 8, 16>}, {pipeline_mode = #tpu.pipeline_mode<synchronous>, transform_indices = @transform_2, window_bounds = array<i64: 128, 128>}, {transform_indices = @transform_3, window_bounds = array<i64: 1, 128, 128>}, {transform_indices = @transform_4, window_bounds = array<i64: 1, 16, 128>}, {transform_indices = @transform_5, window_bounds = array<i64: 1, 2, 128>}, {pipeline_mode = #tpu.pipeline_mode<synchronous>, transform_indices = @transform_6, window_bounds = array<i64: 8, 128>}]} {
    %c0 = arith.constant 0 : index
    %c0_0 = arith.constant 0 : index
    %c0_1 = arith.constant 0 : index
    %0 = vector.load %arg6[%c0, %c0_0, %c0_1] : memref<1x2x128xf32, #tpu.memory_space<vmem>>, vector<1x1x128xf32>
    %1 = vector.shape_cast %0 : vector<1x1x128xf32> to vector<1x128xf32>
    %c0_2 = arith.constant 0 : index
    %c1 = arith.constant 1 : index
    %c0_3 = arith.constant 0 : index
    %2 = vector.load %arg6[%c0_2, %c1, %c0_3] : memref<1x2x128xf32, #tpu.memory_space<vmem>>, vector<1x1x128xf32>
    %3 = vector.shape_cast %2 : vector<1x1x128xf32> to vector<1x128xf32>
    %c0_i32 = arith.constant 0 : i32
    %4 = arith.cmpi eq, %arg0, %c0_i32 : i32
    %5 = arith.extui %4 : i1 to i32
    %c0_i32_4 = arith.constant 0 : i32
    %6 = arith.cmpi ne, %5, %c0_i32_4 : i32
    scf.if %6 {
      %c0_7 = arith.constant 0 : index
      %c0_8 = arith.constant 0 : index
      %10 = vector.load %arg1[%c0_7, %c0_8] : memref<8x128xbf16, #tpu.memory_space<vmem>>, vector<8x128xbf16>
      %c0_9 = arith.constant 0 : index
      %c0_10 = arith.constant 0 : index
      %11 = vector.load %arg3[%c0_9, %c0_10] : memref<128x128xbf16, #tpu.memory_space<vmem>>, vector<128x128xbf16>
      %cst = arith.constant dense<0.000000e+00> : vector<8x128xf32>
      %12 = tpu.matmul %10, %11, %cst {dimension_numbers = #tpu.dot_dimension_numbers<[1], [0], [0], [1], [0, 0, 1, 1], [], []>} : vector<8x128xbf16>, vector<128x128xbf16>, vector<8x128xf32> -> vector<8x128xf32>
      %c0_11 = arith.constant 0 : index
      %c0_12 = arith.constant 0 : index
      %13 = vector.load %arg2[%c0_11, %c0_12] : memref<8x16xbf16, #tpu.memory_space<vmem>>, vector<8x16xbf16>
      %c0_13 = arith.constant 0 : index
      %c0_14 = arith.constant 0 : index
      %c0_15 = arith.constant 0 : index
      %14 = vector.load %arg5[%c0_13, %c0_14, %c0_15] : memref<1x16x128xbf16, #tpu.memory_space<vmem>>, vector<1x16x128xbf16>
      %15 = vector.shape_cast %14 : vector<1x16x128xbf16> to vector<16x128xbf16>
      %cst_16 = arith.constant dense<0.000000e+00> : vector<8x128xf32>
      %16 = tpu.matmul %13, %15, %cst_16 {dimension_numbers = #tpu.dot_dimension_numbers<[1], [0], [0], [1], [0, 0, 1, 1], [], []>} : vector<8x16xbf16>, vector<16x128xbf16>, vector<8x128xf32> -> vector<8x128xf32>
      %17 = arith.addf %12, %16 : vector<8x128xf32>
      %cst_17 = arith.constant dense<0.000000e+00> : vector<128xf32>
      %18 = vector.multi_reduction <add>, %17, %cst_17 [0] : vector<8x128xf32> to vector<128xf32>
      %19 = vector.shape_cast %18 : vector<128xf32> to vector<1x128xf32>
      %cst_18 = arith.constant 8.000000e+00 : f32
      %20 = vector.broadcast %cst_18 : f32 to vector<1x128xf32>
      %21 = arith.divf %19, %20 : vector<1x128xf32>
      %22 = vector.broadcast %21 : vector<1x128xf32> to vector<8x128xf32>
      %23 = arith.subf %17, %22 : vector<8x128xf32>
      %24 = arith.mulf %23, %23 : vector<8x128xf32>
      %cst_19 = arith.constant dense<0.000000e+00> : vector<128xf32>
      %25 = vector.multi_reduction <add>, %24, %cst_19 [0] : vector<8x128xf32> to vector<128xf32>
      %26 = vector.shape_cast %25 : vector<128xf32> to vector<1x128xf32>
      %cst_20 = arith.constant 8.000000e+00 : f32
      %27 = vector.broadcast %cst_20 : f32 to vector<1x128xf32>
      %28 = arith.divf %26, %27 : vector<1x128xf32>
      %cst_21 = arith.constant 1.000000e-03 : f32
      %29 = vector.broadcast %cst_21 : f32 to vector<1x128xf32>
      %30 = arith.addf %28, %29 : vector<1x128xf32>
      %31 = math.rsqrt %30 : vector<1x128xf32>
      %32 = arith.mulf %31, %1 : vector<1x128xf32>
      %33 = vector.broadcast %32 : vector<1x128xf32> to vector<8x128xf32>
      %34 = arith.mulf %23, %33 : vector<8x128xf32>
      %35 = vector.broadcast %3 : vector<1x128xf32> to vector<8x128xf32>
      %36 = arith.addf %34, %35 : vector<8x128xf32>
      %cst_22 = arith.constant 0.000000e+00 : f32
      %37 = vector.broadcast %cst_22 : f32 to vector<8x128xf32>
      %38 = arith.maximumf %36, %37 : vector<8x128xf32>
      %39 = arith.truncf %38 : vector<8x128xf32> to vector<8x128xbf16>
      %c0_23 = arith.constant 0 : index
      %c0_24 = arith.constant 0 : index
      %40 = vector.load %arg7[%c0_23, %c0_24] : memref<8x128xbf16, #tpu.memory_space<vmem>>, vector<8x128xbf16>
      tpu.vector_store %arg7[%c0_23, %c0_24], %39 {strides = array<i32>} : memref<8x128xbf16, #tpu.memory_space<vmem>>, vector<8x128xbf16>,
    } else {
    }
    %c0_i32_5 = arith.constant 0 : i32
    %7 = arith.cmpi sgt, %arg0, %c0_i32_5 : i32
    %8 = arith.extui %7 : i1 to i32
    %c0_i32_6 = arith.constant 0 : i32
    %9 = arith.cmpi ne, %8, %c0_i32_6 : i32
    scf.if %9 {
      %c0_7 = arith.constant 0 : index
      %c0_8 = arith.constant 0 : index
      %10 = vector.load %arg7[%c0_7, %c0_8] : memref<8x128xbf16, #tpu.memory_space<vmem>>, vector<8x128xbf16>
      %c0_9 = arith.constant 0 : index
      %c0_10 = arith.constant 0 : index
      %c0_11 = arith.constant 0 : index
      %11 = vector.load %arg4[%c0_9, %c0_10, %c0_11] : memref<1x128x128xbf16, #tpu.memory_space<vmem>>, vector<1x128x128xbf16>
      %12 = vector.shape_cast %11 : vector<1x128x128xbf16> to vector<128x128xbf16>
      %cst = arith.constant dense<0.000000e+00> : vector<8x128xf32>
      %13 = tpu.matmul %10, %12, %cst {dimension_numbers = #tpu.dot_dimension_numbers<[1], [0], [0], [1], [0, 0, 1, 1], [], []>} : vector<8x128xbf16>, vector<128x128xbf16>, vector<8x128xf32> -> vector<8x128xf32>
      %c0_12 = arith.constant 0 : index
      %c0_13 = arith.constant 0 : index
      %14 = vector.load %arg2[%c0_12, %c0_13] : memref<8x16xbf16, #tpu.memory_space<vmem>>, vector<8x16xbf16>
      %c0_14 = arith.constant 0 : index
      %c0_15 = arith.constant 0 : index
      %c0_16 = arith.constant 0 : index
      %15 = vector.load %arg5[%c0_14, %c0_15, %c0_16] : memref<1x16x128xbf16, #tpu.memory_space<vmem>>, vector<1x16x128xbf16>
      %16 = vector.shape_cast %15 : vector<1x16x128xbf16> to vector<16x128xbf16>
      %cst_17 = arith.constant dense<0.000000e+00> : vector<8x128xf32>
      %17 = tpu.matmul %14, %16, %cst_17 {dimension_numbers = #tpu.dot_dimension_numbers<[1], [0], [0], [1], [0, 0, 1, 1], [], []>} : vector<8x16xbf16>, vector<16x128xbf16>, vector<8x128xf32> -> vector<8x128xf32>
      %18 = arith.addf %13, %17 : vector<8x128xf32>
      %cst_18 = arith.constant dense<0.000000e+00> : vector<128xf32>
      %19 = vector.multi_reduction <add>, %18, %cst_18 [0] : vector<8x128xf32> to vector<128xf32>
      %20 = vector.shape_cast %19 : vector<128xf32> to vector<1x128xf32>
      %cst_19 = arith.constant 8.000000e+00 : f32
      %21 = vector.broadcast %cst_19 : f32 to vector<1x128xf32>
      %22 = arith.divf %20, %21 : vector<1x128xf32>
      %23 = vector.broadcast %22 : vector<1x128xf32> to vector<8x128xf32>
      %24 = arith.subf %18, %23 : vector<8x128xf32>
      %25 = arith.mulf %24, %24 : vector<8x128xf32>
      %cst_20 = arith.constant dense<0.000000e+00> : vector<128xf32>
      %26 = vector.multi_reduction <add>, %25, %cst_20 [0] : vector<8x128xf32> to vector<128xf32>
      %27 = vector.shape_cast %26 : vector<128xf32> to vector<1x128xf32>
      %cst_21 = arith.constant 8.000000e+00 : f32
      %28 = vector.broadcast %cst_21 : f32 to vector<1x128xf32>
      %29 = arith.divf %27, %28 : vector<1x128xf32>
      %cst_22 = arith.constant 1.000000e-03 : f32
      %30 = vector.broadcast %cst_22 : f32 to vector<1x128xf32>
      %31 = arith.addf %29, %30 : vector<1x128xf32>
      %32 = math.rsqrt %31 : vector<1x128xf32>
      %33 = arith.mulf %32, %1 : vector<1x128xf32>
      %34 = vector.broadcast %33 : vector<1x128xf32> to vector<8x128xf32>
      %35 = arith.mulf %24, %34 : vector<8x128xf32>
      %36 = vector.broadcast %3 : vector<1x128xf32> to vector<8x128xf32>
      %37 = arith.addf %35, %36 : vector<8x128xf32>
      %cst_23 = arith.constant 0.000000e+00 : f32
      %38 = vector.broadcast %cst_23 : f32 to vector<8x128xf32>
      %39 = arith.maximumf %37, %38 : vector<8x128xf32>
      %40 = arith.truncf %39 : vector<8x128xf32> to vector<8x128xbf16>
      %c0_24 = arith.constant 0 : index
      %c0_25 = arith.constant 0 : index
      %41 = vector.load %arg7[%c0_24, %c0_25] : memref<8x128xbf16, #tpu.memory_space<vmem>>, vector<8x128xbf16>
      tpu.vector_store %arg7[%c0_24, %c0_25], %40 {strides = array<i32>} : memref<8x128xbf16, #tpu.memory_space<vmem>>, vector<8x128xbf16>,
    } else {
    }
    return
  }
  func.func @transform_0(%arg0: i32) -> (i32, i32) {
    %c0_i32 = arith.constant 0 : i32
    %c0_i32_0 = arith.constant 0 : i32
    %c0_i32_1 = arith.constant 0 : i32
    return %c0_i32, %c0_i32_0 : i32, i32
  }
  func.func @transform_1(%arg0: i32) -> (i32, i32) {
    %c0_i32 = arith.constant 0 : i32
    %c0_i32_0 = arith.constant 0 : i32
    %c0_i32_1 = arith.constant 0 : i32
    return %c0_i32, %c0_i32_0 : i32, i32
  }
  func.func @transform_2(%arg0: i32) -> (i32, i32) {
    %c0_i32 = arith.constant 0 : i32
    %c0_i32_0 = arith.constant 0 : i32
    %c0_i32_1 = arith.constant 0 : i32
    return %c0_i32, %c0_i32_0 : i32, i32
  }
  func.func @transform_3(%arg0: i32) -> (i32, i32, i32) {
    %c1_i32 = arith.constant 1 : i32
    %0 = arith.subi %arg0, %c1_i32 : i32
    %c0_i32 = arith.constant 0 : i32
    %1 = arith.maxsi %0, %c0_i32 : i32
    %c0_i32_0 = arith.constant 0 : i32
    %c0_i32_1 = arith.constant 0 : i32
    %c0_i32_2 = arith.constant 0 : i32
    return %1, %c0_i32_0, %c0_i32_1 : i32, i32, i32
  }
  func.func @transform_4(%arg0: i32) -> (i32, i32, i32) {
    %c0_i32 = arith.constant 0 : i32
    %c0_i32_0 = arith.constant 0 : i32
    %c0_i32_1 = arith.constant 0 : i32
    return %arg0, %c0_i32, %c0_i32_0 : i32, i32, i32
  }
  func.func @transform_5(%arg0: i32) -> (i32, i32, i32) {
    %c0_i32 = arith.constant 0 : i32
    %c0_i32_0 = arith.constant 0 : i32
    %c0_i32_1 = arith.constant 0 : i32
    return %arg0, %c0_i32, %c0_i32_0 : i32, i32, i32
  }
  func.func @transform_6(%arg0: i32) -> (i32, i32) {
    %c0_i32 = arith.constant 0 : i32
    %c0_i32_0 = arith.constant 0 : i32
    %c0_i32_1 = arith.constant 0 : i32
    return %c0_i32, %c0_i32_0 : i32, i32
  }
}

</mosaic_0001>

<llo_original>
// kernel: tpu_custom_call.1
$region0: #{tpu_custom_call.1}
  #allocation0 [shape = 'u32[]', space=smem, size = 0x4, offset = 0x4, fixed_abs, tag = 'smem constant byte address 0x4 - core index']
  #allocation1 [shape = 'u32[144,128]{1,0:T(1,128)}', space=vmem, size = 0x12000, scoped, tag = 'internal scratch']
  %s0 = inlined_call_operand.hbm [shape: bf16[8,128], index: 0, kind: input, shape index: {}]
  %s1 = inlined_call_operand.hbm [shape: bf16[8,16], index: 1, kind: input, shape index: {}]
  %s2 = inlined_call_operand.hbm [shape: bf16[128,128], index: 2, kind: input, shape index: {}]
  %s3 = inlined_call_operand.hbm [shape: bf16[1,128,128], index: 3, kind: input, shape index: {}]
  %s4 = inlined_call_operand.hbm [shape: bf16[2,16,128], index: 4, kind: input, shape index: {}]
  %s5 = inlined_call_operand.vmem [shape: f32[2,2,128], index: 5, kind: input, shape index: {}]
  %s6 = inlined_call_operand.hbm [shape: bf16[8,128], index: 6, kind: output, shape index: {}]
  %s7 = sld [smem:[#allocation0]]
  $region85: #{tpu_custom_call.1} parent=0
    _
  %s9 = ssub.s32 1, %s7
  %s10 = scalar_select 0, %s9, %s7
  $region1: #{tpu_custom_call.1} parent=0
    #allocation2 [shape = 'u8[2048]{0}', space=vmem, size = 0x800, scoped, tag = 'input window, operand 0, single buffered']
    #allocation3 [shape = 's32[2]{0}', space=sflag, size = 0x8, scoped, tag = 'scoped memory for tpu_custom_call.1']
    #allocation4 [shape = 's32[2]{0}', space=sflag, size = 0x8, scoped, tag = 'scoped memory for tpu_custom_call.1']
    #allocation5 [shape = 'u8[2048]{0}', space=vmem, size = 0x800, scoped, tag = 'input window, operand 1, single buffered']
    #allocation6 [shape = 's32[1]{0}', space=sflag, size = 0x4, scoped, tag = 'scoped memory for tpu_custom_call.1']
    #allocation7 [shape = 'u8[32768]{0}', space=vmem, size = 0x8000, scoped, tag = 'input window, operand 2, single buffered']
    #allocation8 [shape = 'u8[65536]{0}', space=vmem, size = 0x10000, scoped, tag = 'input window, operand 3']
    #allocation9 [shape = 's32[2]{0}', space=sflag, size = 0x8, scoped, tag = 'scoped memory for tpu_custom_call.1']
    #allocation10 [shape = 'u8[8192]{0}', space=vmem, size = 0x2000, scoped, tag = 'input window, operand 4']
    #allocation11 [shape = 'u8[2048]{0}', space=vmem, size = 0x800, scoped, tag = 'output window, operand 0, single buffered']
    %11 = vsyncpa [#allocation3], 0
    %12 = vsyncpa [#allocation6], 0
    %13 = vsyncpa [#allocation9], 0
    %s14 = scalar_lea.sflag [#allocation9], 1
    %15 = vsyncpa %s14, 0
    %16 = vsyncpa [#allocation4], 0
    loop: start=0, step=1, limit=4
    $region2: #{tpu_custom_call.1} parent=1 // loop_pre_header
      _
    $region3: #{tpu_custom_call.1} parent=1 // loop_header
      %s18 = sphi 0, %s22
      %p19 = scmp.ge.s32.totalorder %s18, 4
      %s26 = sphi 0, %s26
      %s28 = sphi 0, %s26
      %s29 = sphi 0, %s28
      %s43 = sphi 0, %s29
      %s47 = sphi 0, %s47
      %s49 = sphi 0, %s47
      %s50 = sphi 0, %s49
      %s64 = sphi 0, %s50
      %s68 = sphi 0, %s68
      %s70 = sphi 0, %s68
      %s71 = sphi 0, %s70
      %s85 = sphi 0, %s71
      %s97 = sphi 0, %s99
      %s100 = sphi 0, %s97
      %s101 = sphi 0, %s100
      %s117 = sphi 0, %s101
      %s123 = sphi 0, %s125
      %s126 = sphi 0, %s123
      %s127 = sphi 0, %s126
      %s143 = sphi 0, %s127
      %s149 = sphi 0, %s151
      %s152 = sphi 0, %s149
      %s153 = sphi 0, %s152
      %s169 = sphi 0, %s153
      %s173 = sphi 0, %s173
      %s175 = sphi 0, %s173
      %s176 = sphi 0, %s175
      %s190 = sphi 0, %s176
    $region4: #{tpu_custom_call.1} parent=1 // loop_header_branch
      %21 = sbr.rel (%p19) target = $region8
    $region5: #{tpu_custom_call.1} parent=1 // loop_body
      %s23 = ssub.s32 %s18, 1
      %s24 = ssub.s32 %s18, 2
      %s25 = sadd.s32 %s18, 1
      %s27 = sadd.s32 %s26, 1
      %p30 = scmp.eq.s32.totalorder %s18, 1
      %p31 = scmp.ne.s32.totalorder %s26, %s28
      %p32 = scmp.eq.s32.totalorder %s18, 0
      %p33 = por %p31, %p32
      %p34 = scmp.ne.s32.totalorder %s26, %s28
      %p35 = scmp.eq.s32.totalorder %s23, 1
      %p36 = por %p34, %p35
      %p37 = scmp.ne.s32.totalorder %s28, %s29
      %p38 = scmp.eq.s32.totalorder %s23, 0
      %p39 = por %p37, %p38
      %p40 = scmp.ne.s32.totalorder %s28, %s29
      %p41 = scmp.eq.s32.totalorder %s24, 1
      %p42 = por %p40, %p41
      %p44 = scmp.ne.s32.totalorder %s29, %s43
      %p45 = scmp.eq.s32.totalorder %s24, 0
      %p46 = por %p44, %p45
      %s48 = sadd.s32 %s47, 1
      %p51 = scmp.eq.s32.totalorder %s18, 1
      %p52 = scmp.ne.s32.totalorder %s47, %s49
      %p53 = scmp.eq.s32.totalorder %s18, 0
      %p54 = por %p52, %p53
      %p55 = scmp.ne.s32.totalorder %s47, %s49
      %p56 = scmp.eq.s32.totalorder %s23, 1
      %p57 = por %p55, %p56
      %p58 = scmp.ne.s32.totalorder %s49, %s50
      %p59 = scmp.eq.s32.totalorder %s23, 0
      %p60 = por %p58, %p59
      %p61 = scmp.ne.s32.totalorder %s49, %s50
      %p62 = scmp.eq.s32.totalorder %s24, 1
      %p63 = por %p61, %p62
      %p65 = scmp.ne.s32.totalorder %s50, %s64
      %p66 = scmp.eq.s32.totalorder %s24, 0
      %p67 = por %p65, %p66
      %s69 = sadd.s32 %s68, 1
      %p72 = scmp.eq.s32.totalorder %s18, 1
      %p73 = scmp.ne.s32.totalorder %s68, %s70
      %p74 = scmp.eq.s32.totalorder %s18, 0
      %p75 = por %p73, %p74
      %p76 = scmp.ne.s32.totalorder %s68, %s70
      %p77 = scmp.eq.s32.totalorder %s23, 1
      %p78 = por %p76, %p77
      %p79 = scmp.ne.s32.totalorder %s70, %s71
      %p80 = scmp.eq.s32.totalorder %s23, 0
      %p81 = por %p79, %p80
      %p82 = scmp.ne.s32.totalorder %s70, %s71
      %p83 = scmp.eq.s32.totalorder %s24, 1
      %p84 = por %p82, %p83
      %p86 = scmp.ne.s32.totalorder %s71, %s85
      %p87 = scmp.eq.s32.totalorder %s24, 0
      %p88 = por %p86, %p87
      %s89 = ssub.s32 %s18, 1
      %p90 = scmp.gt.s32.totalorder %s89, 0
      %s91 = scalar_select %p90, %s89, 0
      %s92 = ssub.s32 %s25, 1
      %p93 = scmp.gt.s32.totalorder %s92, 0
      %s94 = scalar_select %p93, %s92, 0
      %s95 = ssub.s32 %s91, %s94
      %p96 = scmp.eq.s32.totalorder %s95, 0
      %s98 = sadd.s32 %s97, 1
      %s99 = scalar_select %p96, %s97, %s98
      %p102 = pneg %p96
      %p103 = scmp.eq.s32.totalorder %s18, 1
      %p104 = por %p102, %p103
      %p105 = scmp.ne.s32.totalorder %s97, %s100
      %p106 = scmp.eq.s32.totalorder %s18, 0
      %p107 = por %p105, %p106
      %p108 = scmp.ne.s32.totalorder %s97, %s100
      %p109 = scmp.eq.s32.totalorder %s23, 1
      %p110 = por %p108, %p109
      %p111 = scmp.ne.s32.totalorder %s100, %s101
      %p112 = scmp.eq.s32.totalorder %s23, 0
      %p113 = por %p111, %p112
      %p114 = scmp.ne.s32.totalorder %s100, %s101
      %p115 = scmp.eq.s32.totalorder %s24, 1
      %p116 = por %p114, %p115
      %p118 = scmp.ne.s32.totalorder %s101, %s117
      %p119 = scmp.eq.s32.totalorder %s24, 0
      %p120 = por %p118, %p119
      %s121 = ssub.s32 %s18, %s25
      %p122 = scmp.eq.s32.totalorder %s121, 0
      %s124 = sadd.s32 %s123, 1
      %s125 = scalar_select %p122, %s123, %s124
      %p128 = pneg %p122
      %p129 = scmp.eq.s32.totalorder %s18, 1
      %p130 = por %p128, %p129
      %p131 = scmp.ne.s32.totalorder %s123, %s126
      %p132 = scmp.eq.s32.totalorder %s18, 0
      %p133 = por %p131, %p132
      %p134 = scmp.ne.s32.totalorder %s123, %s126
      %p135 = scmp.eq.s32.totalorder %s23, 1
      %p136 = por %p134, %p135
      %p137 = scmp.ne.s32.totalorder %s126, %s127
      %p138 = scmp.eq.s32.totalorder %s23, 0
      %p139 = por %p137, %p138
      %p140 = scmp.ne.s32.totalorder %s126, %s127
      %p141 = scmp.eq.s32.totalorder %s24, 1
      %p142 = por %p140, %p141
      %p144 = scmp.ne.s32.totalorder %s127, %s143
      %p145 = scmp.eq.s32.totalorder %s24, 0
      %p146 = por %p144, %p145
      %s147 = ssub.s32 %s18, %s25
      %p148 = scmp.eq.s32.totalorder %s147, 0
      %s150 = sadd.s32 %s149, 1
      %s151 = scalar_select %p148, %s149, %s150
      %p154 = pneg %p148
      %p155 = scmp.eq.s32.totalorder %s18, 1
      %p156 = por %p154, %p155
      %p157 = scmp.ne.s32.totalorder %s149, %s152
      %p158 = scmp.eq.s32.totalorder %s18, 0
      %p159 = por %p157, %p158
      %p160 = scmp.ne.s32.totalorder %s149, %s152
      %p161 = scmp.eq.s32.totalorder %s23, 1
      %p162 = por %p160, %p161
      %p163 = scmp.ne.s32.totalorder %s152, %s153
      %p164 = scmp.eq.s32.totalorder %s23, 0
      %p165 = por %p163, %p164
      %p166 = scmp.ne.s32.totalorder %s152, %s153
      %p167 = scmp.eq.s32.totalorder %s24, 1
      %p168 = por %p166, %p167
      %p170 = scmp.ne.s32.totalorder %s153, %s169
      %p171 = scmp.eq.s32.totalorder %s24, 0
      %p172 = por %p170, %p171
      %s174 = sadd.s32 %s173, 1
      %p177 = scmp.eq.s32.totalorder %s18, 1
      %p178 = scmp.ne.s32.totalorder %s173, %s175
      %p179 = scmp.eq.s32.totalorder %s18, 0
      %p180 = por %p178, %p179
      %p181 = scmp.ne.s32.totalorder %s173, %s175
      %p182 = scmp.eq.s32.totalorder %s23, 1
      %p183 = por %p181, %p182
      %p184 = scmp.ne.s32.totalorder %s175, %s176
      %p185 = scmp.eq.s32.totalorder %s23, 0
      %p186 = por %p184, %p185
      %p187 = scmp.ne.s32.totalorder %s175, %s176
      %p188 = scmp.eq.s32.totalorder %s24, 1
      %p189 = por %p187, %p188
      %p191 = scmp.ne.s32.totalorder %s176, %s190
      %p192 = scmp.eq.s32.totalorder %s24, 0
      %p193 = por %p191, %p192
      %p194 = scmp.le.s32.totalorder 1, %s18
      %p195 = scmp.lt.s32.totalorder %s18, 3
      %p196 = pnand %p194, %p195
      %p197 = pneg %p196
      // Predicated region
      $region9: #{tpu_custom_call.1} parent=5 // pred_check
        _
      $region10: #{tpu_custom_call.1} parent=5 // pred_check_branch
        %199 = sbr.rel (%p196) target = $region12
      $region11: #{tpu_custom_call.1} parent=5 // pred_region
        %s200 = ssub.s32 %s18, 1
        // Predicated region
        $region13: #{tpu_custom_call.1} parent=11 // pred_check
          %p201 = pneg %p39
        $region14: #{tpu_custom_call.1} parent=11 // pred_check_branch
          %203 = sbr.rel (%p201) target = $region16
        $region15: #{tpu_custom_call.1} parent=11 // pred_region
          %s205 = ssub.s32 64, 64
          %206 = vsyncadd [#allocation3], %s205
          %s208 = sshll.u32 [#allocation2], 4
          %s209 = int_to_ptr.vmem [resolvable:$true] %s208
          %211 = dma.hbm_to_vmem [thread:$0]  %s0, 64, %s209, [#allocation3]
        $region16: #{tpu_custom_call.1} parent=11 // pred_fallthru
          _
        // Predicated region
        $region17: #{tpu_custom_call.1} parent=11 // pred_check
          %p212 = pneg %p60
        $region18: #{tpu_custom_call.1} parent=11 // pred_check_branch
          %214 = sbr.rel (%p212) target = $region20
        $region19: #{tpu_custom_call.1} parent=11 // pred_region
          %s216 = ssub.s32 64, 64
          %217 = vsyncadd [#allocation6], %s216
          %s219 = sshll.u32 [#allocation5], 4
          %s220 = int_to_ptr.vmem [resolvable:$true] %s219
          %222 = dma.hbm_to_vmem [thread:$0]  %s1, 64, %s220, [#allocation6]
        $region20: #{tpu_custom_call.1} parent=11 // pred_fallthru
          _
        // Predicated region
        $region21: #{tpu_custom_call.1} parent=11 // pred_check
          %p223 = pneg %p81
        $region22: #{tpu_custom_call.1} parent=11 // pred_check_branch
          %225 = sbr.rel (%p223) target = $region24
        $region23: #{tpu_custom_call.1} parent=11 // pred_region
          %s227 = ssub.s32 1024, 1024
          %228 = vsyncadd [#allocation6], %s227
          %s229 = sshll.u32 [#allocation7], 4
          %s230 = int_to_ptr.vmem [resolvable:$true] %s229
          %235 = dma.hbm_to_vmem [thread:$0]  %s2, 1024, %s230, [#allocation6], 64, 64, 4
        $region24: #{tpu_custom_call.1} parent=11 // pred_fallthru
          _
      $region12: #{tpu_custom_call.1} parent=5 // pred_fallthru
        _
      %p236 = scmp.lt.s32.totalorder %s18, 2
      // Predicated region
      $region25: #{tpu_custom_call.1} parent=5 // pred_check
        %p237 = pneg %p236
      $region26: #{tpu_custom_call.1} parent=5 // pred_check_branch
        %239 = sbr.rel (%p237) target = $region28
      $region27: #{tpu_custom_call.1} parent=5 // pred_region
        // Predicated region
        $region29: #{tpu_custom_call.1} parent=27 // pred_check
          %p240 = pneg %p107
        $region30: #{tpu_custom_call.1} parent=27 // pred_check_branch
          %242 = sbr.rel (%p240) target = $region32
        $region31: #{tpu_custom_call.1} parent=27 // pred_region
          %s243 = sand.u32 %s18, 1
          %s244 = scalar_lea.sflag [#allocation9], %s243
          %s245 = sand.u32 %s97, 1
          %s246 = smul.addr %s245, 64
          %s247 = scalar_lea.vmem [#allocation8], %s246
          %s248 = ssub.s32 %s18, 1
          %p249 = scmp.gt.s32.totalorder %s248, 0
          %s250 = scalar_select %p249, %s248, 0
          %s252 = ssub.s32 1024, 1024
          %253 = vsyncadd %s244, %s252
          %s254 = smul.addr %s250, 16
          %s255 = smul.addr %s254, 64
          %s256 = scalar_lea.hbm %s3, %s255
          %s257 = sshll.u32 %s247, 4
          %s258 = int_to_ptr.vmem [resolvable:$true] %s257
          %263 = dma.hbm_to_vmem [thread:$0]  %s256, 1024, %s258, %s244, 64, 64, 4
        $region32: #{tpu_custom_call.1} parent=27 // pred_fallthru
          _
        // Predicated region
        $region33: #{tpu_custom_call.1} parent=27 // pred_check
          %p264 = pneg %p133
        $region34: #{tpu_custom_call.1} parent=27 // pred_check_branch
          %266 = sbr.rel (%p264) target = $region36
        $region35: #{tpu_custom_call.1} parent=27 // pred_region
          %s267 = sand.u32 %s18, 1
          %s268 = scalar_lea.sflag [#allocation9], %s267
          %s269 = sand.u32 %s123, 1
          %s270 = smul.addr %s269, 8
          %s271 = scalar_lea.vmem [#allocation10], %s270
          %s273 = ssub.s32 128, 128
          %274 = vsyncadd %s268, %s273
          %s275 = smul.addr %s18, 2
          %s276 = smul.addr %s275, 64
          %s277 = scalar_lea.hbm %s4, %s276
          %s278 = sshll.u32 %s271, 4
          %s279 = int_to_ptr.vmem [resolvable:$true] %s278
          %284 = dma.hbm_to_vmem [thread:$0]  %s277, 128, %s279, %s268, 64, 64, 4
        $region36: #{tpu_custom_call.1} parent=27 // pred_fallthru
          _
        // Predicated region
        $region37: #{tpu_custom_call.1} parent=27 // pred_check
          %p285 = pneg %p159
        $region38: #{tpu_custom_call.1} parent=27 // pred_check_branch
          %287 = sbr.rel (%p285) target = $region40
        $region39: #{tpu_custom_call.1} parent=27 // pred_region
          %p288 = scmp.lt.s32.totalorder %s18, 1
          %s289 = scalar_select %p288, %s18, 1
          %s290 = smul.addr %s289, 2
          %s291 = scalar_lea.vmem %s5, %s290
        $region40: #{tpu_custom_call.1} parent=27 // pred_fallthru
          _
      $region28: #{tpu_custom_call.1} parent=5 // pred_fallthru
        _
      %p292 = scmp.le.s32.totalorder 1, %s18
      %p293 = scmp.lt.s32.totalorder %s18, 3
      %p294 = pnand %p292, %p293
      %p295 = pneg %p294
      // Predicated region
      $region41: #{tpu_custom_call.1} parent=5 // pred_check
        _
      $region42: #{tpu_custom_call.1} parent=5 // pred_check_branch
        %297 = sbr.rel (%p294) target = $region44
      $region43: #{tpu_custom_call.1} parent=5 // pred_region
        %s298 = ssub.s32 %s18, 1
        // Predicated region
        $region45: #{tpu_custom_call.1} parent=43 // pred_check
          %p299 = pneg %p39
        $region46: #{tpu_custom_call.1} parent=43 // pred_check_branch
          %301 = sbr.rel (%p299) target = $region48
        $region47: #{tpu_custom_call.1} parent=43 // pred_region
          %302 = dma.done [#allocation3], 64
        $region48: #{tpu_custom_call.1} parent=43 // pred_fallthru
          _
        // Predicated region
        $region49: #{tpu_custom_call.1} parent=43 // pred_check
          %p303 = pneg %p60
        $region50: #{tpu_custom_call.1} parent=43 // pred_check_branch
          %305 = sbr.rel (%p303) target = $region52
        $region51: #{tpu_custom_call.1} parent=43 // pred_region
          %306 = dma.done [#allocation6], 64
        $region52: #{tpu_custom_call.1} parent=43 // pred_fallthru
          _
        // Predicated region
        $region53: #{tpu_custom_call.1} parent=43 // pred_check
          %p307 = pneg %p81
        $region54: #{tpu_custom_call.1} parent=43 // pred_check_branch
          %309 = sbr.rel (%p307) target = $region56
        $region55: #{tpu_custom_call.1} parent=43 // pred_region
          %310 = dma.done [#allocation6], 1024
        $region56: #{tpu_custom_call.1} parent=43 // pred_fallthru
          _
        %s311 = sand.u32 %s23, 1
        %s312 = scalar_lea.sflag [#allocation9], %s311
        %s313 = sand.u32 %s100, 1
        %s314 = smul.addr %s313, 64
        %s315 = scalar_lea.vmem [#allocation8], %s314
        // Predicated region
        $region57: #{tpu_custom_call.1} parent=43 // pred_check
          %p316 = pneg %p113
        $region58: #{tpu_custom_call.1} parent=43 // pred_check_branch
          %318 = sbr.rel (%p316) target = $region60
        $region59: #{tpu_custom_call.1} parent=43 // pred_region
          %319 = dma.done %s312, 1024
        $region60: #{tpu_custom_call.1} parent=43 // pred_fallthru
          _
        %s320 = sand.u32 %s23, 1
        %s321 = scalar_lea.sflag [#allocation9], %s320
        %s322 = sand.u32 %s126, 1
        %s323 = smul.addr %s322, 8
        %s324 = scalar_lea.vmem [#allocation10], %s323
        // Predicated region
        $region61: #{tpu_custom_call.1} parent=43 // pred_check
          %p325 = pneg %p139
        $region62: #{tpu_custom_call.1} parent=43 // pred_check_branch
          %327 = sbr.rel (%p325) target = $region64
        $region63: #{tpu_custom_call.1} parent=43 // pred_region
          %328 = dma.done %s321, 128
        $region64: #{tpu_custom_call.1} parent=43 // pred_fallthru
          _
        %p329 = pneg %p39
        %p330 = pneg %p36
        %p331 = pneg %p60
        %p332 = pneg %p57
        %p333 = pneg %p81
        %p334 = pneg %p78
        %s335 = sand.u32 %s23, 1
        %s336 = scalar_lea.sflag [#allocation9], %s335
        %s337 = sand.u32 %s100, 1
        %s338 = smul.addr %s337, 64
        %s339 = scalar_lea.vmem [#allocation8], %s338
        %p340 = pneg %p113
        %p341 = pneg %p110
        %s342 = sand.u32 %s23, 1
        %s343 = scalar_lea.sflag [#allocation9], %s342
        %s344 = sand.u32 %s126, 1
        %s345 = smul.addr %s344, 8
        %s346 = scalar_lea.vmem [#allocation10], %s345
        %p347 = pneg %p139
        %p348 = pneg %p136
        %p349 = scmp.lt.s32.totalorder %s23, 1
        %s350 = scalar_select %p349, %s23, 1
        %s351 = smul.addr %s350, 2
        %s352 = scalar_lea.vmem %s5, %s351
        %p353 = pneg %p165
        %p354 = pneg %p162
        %p355 = pneg %p186
        %p356 = pneg %p183
        %s357 = ssub.s32 %s23, 1
        %p358 = scmp.gt.s32.totalorder %s357, 0
        %s359 = scalar_select %p358, %s357, 0
        %p360 = scmp.lt.s32.totalorder %s23, 1
        %s361 = scalar_select %p360, %s23, 1
        %s362 = smul.addr %s361, 2
        %s363 = scalar_lea.vmem %s5, %s362
        %v365 = vld [vmem:[%s363] sm:$0x1]
        %v366 = vld [vmem:[%s363 + $0x1] sm:$0x1]
        %p367 = scmp.eq.s32.totalorder %s23, 0
        // Predicated region
        $region65: #{tpu_custom_call.1} parent=43 // pred_check
          %p368 = pneg %p367
        $region66: #{tpu_custom_call.1} parent=43 // pred_check_branch
          %370 = sbr.rel (%p368) target = $region68
        $region67: #{tpu_custom_call.1} parent=43 // pred_region
          %v371 = vld [vmem:[#allocation2] sm:$0xf]
          %v372 = vld [vmem:[#allocation7] sm:$0xf]
          %v373 = vld [vmem:[#allocation7 + $0x4] sm:$0xf]
          %v374 = vld [vmem:[#allocation7 + $0x8] sm:$0xf]
          %v375 = vld [vmem:[#allocation7 + $0xc] sm:$0xf]
          %v376 = vld [vmem:[#allocation7 + $0x10] sm:$0xf]
          %v377 = vld [vmem:[#allocation7 + $0x14] sm:$0xf]
          %v378 = vld [vmem:[#allocation7 + $0x18] sm:$0xf]
          %v379 = vld [vmem:[#allocation7 + $0x1c] sm:$0xf]
          %v380 = vld [vmem:[#allocation7 + $0x20] sm:$0xf]
          %v381 = vld [vmem:[#allocation7 + $0x24] sm:$0xf]
          %v382 = vld [vmem:[#allocation7 + $0x28] sm:$0xf]
          %v383 = vld [vmem:[#allocation7 + $0x2c] sm:$0xf]
          %v384 = vld [vmem:[#allocation7 + $0x30] sm:$0xf]
          %v385 = vld [vmem:[#allocation7 + $0x34] sm:$0xf]
          %v386 = vld [vmem:[#allocation7 + $0x38] sm:$0xf]
          %v387 = vld [vmem:[#allocation7 + $0x3c] sm:$0xf]
          %v388 = vld [vmem:[#allocation5] sm:$0xf]
          %v389 = vld [vmem:[%s324] sm:$0xf]
          %v390 = vld [vmem:[%s324 + $0x4] sm:$0xf]
          %v393 = vunpack.c.l.b16 %v389
          %v394 = vunpack.c.l.b16 %v390
          %v395 = vpack.c.b16 %v394, %v393
          %vm397 = vcmask 130048
          %v399 = vsel %vm397, %v388, 0
          %401 = vmatprep.subr.bf16.mxu0 0
          %402 = vmatpush1.bf16.msra.mxu0 %v395
          %403 = vmatprep.subr.bf16.mxu0 0
          %404 = vmatpush1.bf16.msra.mxu0 0
          %405 = vmatprep.subr.bf16.mxu0 0
          %406 = vmatpush1.bf16.msra.mxu0 0
          %407 = vmatprep.subr.bf16.mxu0 0
          %408 = vmatpush1.bf16.msra.mxu0 0
          %409 = vmatprep.subr.bf16.mxu0 0
          %410 = vmatpush1.bf16.msra.mxu0 0
          %411 = vmatprep.subr.bf16.mxu0 0
          %412 = vmatpush1.bf16.msra.mxu0 0
          %413 = vmatprep.subr.bf16.mxu0 0
          %414 = vmatpush1.bf16.msra.mxu0 0
          %415 = vmatprep.subr.bf16.mxu0 0
          %416 = vmatpush1.bf16.msra.mxu0 0
          %417 = vmatprep.subr.bf16.mxu0 0
          %418 = vmatpush1.bf16.msra.mxu0 0
          %419 = vmatprep.subr.bf16.mxu0 0
          %420 = vmatpush1.bf16.msra.mxu0 0
          %421 = vmatprep.subr.bf16.mxu0 0
          %422 = vmatpush1.bf16.msra.mxu0 0
          %423 = vmatprep.subr.bf16.mxu0 0
          %424 = vmatpush1.bf16.msra.mxu0 0
          %425 = vmatprep.subr.bf16.mxu0 0
          %426 = vmatpush1.bf16.msra.mxu0 0
          %427 = vmatprep.subr.bf16.mxu0 0
          %428 = vmatpush1.bf16.msra.mxu0 0
          %429 = vmatprep.subr.bf16.mxu0 0
          %430 = vmatpush1.bf16.msra.mxu0 0
          %431 = vmatprep.subr.bf16.mxu0 0
          %432 = vmatpush1.bf16.msra.mxu0 0
          %433 = vmatprep.mubr.bf16.mxu0 0
          %434 = vmatmul.mubr.bf16.gmra.mrb[0].mxu0 %v399
          %v435 = vpop.f32.mrb[0].mxu0
          %v436 = vadd.f32 0.0, %v435
          %v437 = vpop.f32.mrb[0].mxu0
          %v438 = vpop.f32.mrb[0].mxu0
          %v439 = vpop.f32.mrb[0].mxu0
          %440 = vdwg.mxu0
          %v457 = vunpack.c.l.b16 %v372
          %v458 = vunpack.c.l.b16 %v373
          %v459 = vunpack.c.l.b16 %v374
          %v460 = vunpack.c.l.b16 %v375
          %v461 = vunpack.c.l.b16 %v376
          %v462 = vunpack.c.l.b16 %v377
          %v463 = vunpack.c.l.b16 %v378
          %v464 = vunpack.c.l.b16 %v379
          %v465 = vunpack.c.l.b16 %v380
          %v466 = vunpack.c.l.b16 %v381
          %v467 = vunpack.c.l.b16 %v382
          %v468 = vunpack.c.l.b16 %v383
          %v469 = vunpack.c.l.b16 %v384
          %v470 = vunpack.c.l.b16 %v385
          %v471 = vunpack.c.l.b16 %v386
          %v472 = vunpack.c.l.b16 %v387
          %v473 = vpack.c.b16 %v458, %v457
          %v474 = vpack.c.b16 %v460, %v459
          %v475 = vpack.c.b16 %v462, %v461
          %v476 = vpack.c.b16 %v464, %v463
          %v477 = vpack.c.b16 %v466, %v465
          %v478 = vpack.c.b16 %v468, %v467
          %v479 = vpack.c.b16 %v470, %v469
          %v480 = vpack.c.b16 %v472, %v471
          %489 = vmatprep.subr.bf16.mxu0 0
          %490 = vmatpush1.bf16.msra.mxu0 %v473
          %491 = vmatprep.subr.bf16.mxu0 0
          %492 = vmatpush1.bf16.msra.mxu0 %v474
          %493 = vmatprep.subr.bf16.mxu0 0
          %494 = vmatpush1.bf16.msra.mxu0 %v475
          %495 = vmatprep.subr.bf16.mxu0 0
          %496 = vmatpush1.bf16.msra.mxu0 %v476
          %497 = vmatprep.subr.bf16.mxu0 0
          %498 = vmatpush1.bf16.msra.mxu0 %v477
          %499 = vmatprep.subr.bf16.mxu0 0
          %500 = vmatpush1.bf16.msra.mxu0 %v478
          %501 = vmatprep.subr.bf16.mxu0 0
          %502 = vmatpush1.bf16.msra.mxu0 %v479
          %503 = vmatprep.subr.bf16.mxu0 0
          %504 = vmatpush1.bf16.msra.mxu0 %v480
          %505 = vmatprep.subr.bf16.mxu0 0
          %506 = vmatpush1.bf16.msra.mxu0 0
          %507 = vmatprep.subr.bf16.mxu0 0
          %508 = vmatpush1.bf16.msra.mxu0 0
          %509 = vmatprep.subr.bf16.mxu0 0
          %510 = vmatpush1.bf16.msra.mxu0 0
          %511 = vmatprep.subr.bf16.mxu0 0
          %512 = vmatpush1.bf16.msra.mxu0 0
          %513 = vmatprep.subr.bf16.mxu0 0
          %514 = vmatpush1.bf16.msra.mxu0 0
          %515 = vmatprep.subr.bf16.mxu0 0
          %516 = vmatpush1.bf16.msra.mxu0 0
          %517 = vmatprep.subr.bf16.mxu0 0
          %518 = vmatpush1.bf16.msra.mxu0 0
          %519 = vmatprep.subr.bf16.mxu0 0
          %520 = vmatpush1.bf16.msra.mxu0 0
          %521 = vmatprep.mubr.bf16.mxu0 0
          %522 = vmatmul.mubr.bf16.gmra.mrb[0].mxu0 %v371
          %v523 = vpop.f32.mrb[0].mxu0
          %v524 = vadd.f32 %v436, %v523
          %v525 = vpop.f32.mrb[0].mxu0
          %v526 = vpop.f32.mrb[0].mxu0
          %v527 = vpop.f32.mrb[0].mxu0
          %528 = vdwg.mxu0
          %v529 = vrot.slane %v524, 4
          %v530 = vadd.f32 %v524, %v529
          %v531 = vrot.slane %v530, 2
          %v532 = vadd.f32 %v530, %v531
          %v533 = vrot.slane %v532, 1
          %v534 = vadd.f32 %v532, %v533
          %v535 = vrcp.pop 8.0
          %v536 = vmul.f32 %v534, %v535
          %v537 = vsub.f32 %v524, %v536
          %v538 = vmul.f32 %v537, %v537
          %v539 = vrot.slane %v538, 4
          %v540 = vadd.f32 %v538, %v539
          %v541 = vrot.slane %v540, 2
          %v542 = vadd.f32 %v540, %v541
          %v543 = vrot.slane %v542, 1
          %v544 = vadd.f32 %v542, %v543
          %v545 = vmul.f32 %v544, %v535
          %v546 = vadd.f32 %v545, 0.001
          %v547 = vrsqrt.pop %v546
          %v548 = vmul.f32 %v547, %v365
          %v549 = vlaneseq
          %v550 = vshrl.u32 %v549, 7
          %v551 = vsub.s32 0, %v550
          %v552 = vrot.slane %v548, %v551
          %v553 = vmul.f32 %v537, %v552
          %v554 = vlaneseq
          %v555 = vshrl.u32 %v554, 7
          %v556 = vsub.s32 0, %v555
          %v557 = vrot.slane %v366, %v556
          %v558 = vadd.f32 %v553, %v557
          %v559 = vmax.f32 %v558, 0.0
          %v560 = vpack.c.bf16 %v559, %v559
          %561 = vst [vmem:[#allocation11] sm:$0xf] %v560
        $region68: #{tpu_custom_call.1} parent=43 // pred_fallthru
          _
        %p562 = scmp.gt.s32.totalorder %s23, 0
        // Predicated region
        $region69: #{tpu_custom_call.1} parent=43 // pred_check
          %p563 = pneg %p562
        $region70: #{tpu_custom_call.1} parent=43 // pred_check_branch
          %565 = sbr.rel (%p563) target = $region72
        $region71: #{tpu_custom_call.1} parent=43 // pred_region
          %v566 = vld [vmem:[#allocation11] sm:$0xf]
          %v567 = vld [vmem:[%s315] sm:$0xf]
          %v568 = vld [vmem:[%s315 + $0x4] sm:$0xf]
          %v569 = vld [vmem:[%s315 + $0x8] sm:$0xf]
          %v570 = vld [vmem:[%s315 + $0xc] sm:$0xf]
          %v571 = vld [vmem:[%s315 + $0x10] sm:$0xf]
          %v572 = vld [vmem:[%s315 + $0x14] sm:$0xf]
          %v573 = vld [vmem:[%s315 + $0x18] sm:$0xf]
          %v574 = vld [vmem:[%s315 + $0x1c] sm:$0xf]
          %v575 = vld [vmem:[%s315 + $0x20] sm:$0xf]
          %v576 = vld [vmem:[%s315 + $0x24] sm:$0xf]
          %v577 = vld [vmem:[%s315 + $0x28] sm:$0xf]
          %v578 = vld [vmem:[%s315 + $0x2c] sm:$0xf]
          %v579 = vld [vmem:[%s315 + $0x30] sm:$0xf]
          %v580 = vld [vmem:[%s315 + $0x34] sm:$0xf]
          %v581 = vld [vmem:[%s315 + $0x38] sm:$0xf]
          %v582 = vld [vmem:[%s315 + $0x3c] sm:$0xf]
          %v583 = vld [vmem:[#allocation5] sm:$0xf]
          %v584 = vld [vmem:[%s324] sm:$0xf]
          %v585 = vld [vmem:[%s324 + $0x4] sm:$0xf]
          %v588 = vunpack.c.l.b16 %v584
          %v589 = vunpack.c.l.b16 %v585
          %v590 = vpack.c.b16 %v589, %v588
          %vm592 = vcmask 130048
          %v594 = vsel %vm592, %v583, 0
          %596 = vmatprep.subr.bf16.mxu0 0
          %597 = vmatpush1.bf16.msra.mxu0 %v590
          %598 = vmatprep.subr.bf16.mxu0 0
          %599 = vmatpush1.bf16.msra.mxu0 0
          %600 = vmatprep.subr.bf16.mxu0 0
          %601 = vmatpush1.bf16.msra.mxu0 0
          %602 = vmatprep.subr.bf16.mxu0 0
          %603 = vmatpush1.bf16.msra.mxu0 0
          %604 = vmatprep.subr.bf16.mxu0 0
          %605 = vmatpush1.bf16.msra.mxu0 0
          %606 = vmatprep.subr.bf16.mxu0 0
          %607 = vmatpush1.bf16.msra.mxu0 0
          %608 = vmatprep.subr.bf16.mxu0 0
          %609 = vmatpush1.bf16.msra.mxu0 0
          %610 = vmatprep.subr.bf16.mxu0 0
          %611 = vmatpush1.bf16.msra.mxu0 0
          %612 = vmatprep.subr.bf16.mxu0 0
          %613 = vmatpush1.bf16.msra.mxu0 0
          %614 = vmatprep.subr.bf16.mxu0 0
          %615 = vmatpush1.bf16.msra.mxu0 0
          %616 = vmatprep.subr.bf16.mxu0 0
          %617 = vmatpush1.bf16.msra.mxu0 0
          %618 = vmatprep.subr.bf16.mxu0 0
          %619 = vmatpush1.bf16.msra.mxu0 0
          %620 = vmatprep.subr.bf16.mxu0 0
          %621 = vmatpush1.bf16.msra.mxu0 0
          %622 = vmatprep.subr.bf16.mxu0 0
          %623 = vmatpush1.bf16.msra.mxu0 0
          %624 = vmatprep.subr.bf16.mxu0 0
          %625 = vmatpush1.bf16.msra.mxu0 0
          %626 = vmatprep.subr.bf16.mxu0 0
          %627 = vmatpush1.bf16.msra.mxu0 0
          %628 = vmatprep.mubr.bf16.mxu0 0
          %629 = vmatmul.mubr.bf16.gmra.mrb[0].mxu0 %v594
          %v630 = vpop.f32.mrb[0].mxu0
          %v631 = vadd.f32 0.0, %v630
          %v632 = vpop.f32.mrb[0].mxu0
          %v633 = vpop.f32.mrb[0].mxu0
          %v634 = vpop.f32.mrb[0].mxu0
          %635 = vdwg.mxu0
          %v652 = vunpack.c.l.b16 %v567
          %v653 = vunpack.c.l.b16 %v568
          %v654 = vunpack.c.l.b16 %v569
          %v655 = vunpack.c.l.b16 %v570
          %v656 = vunpack.c.l.b16 %v571
          %v657 = vunpack.c.l.b16 %v572
          %v658 = vunpack.c.l.b16 %v573
          %v659 = vunpack.c.l.b16 %v574
          %v660 = vunpack.c.l.b16 %v575
          %v661 = vunpack.c.l.b16 %v576
          %v662 = vunpack.c.l.b16 %v577
          %v663 = vunpack.c.l.b16 %v578
          %v664 = vunpack.c.l.b16 %v579
          %v665 = vunpack.c.l.b16 %v580
          %v666 = vunpack.c.l.b16 %v581
          %v667 = vunpack.c.l.b16 %v582
          %v668 = vpack.c.b16 %v653, %v652
          %v669 = vpack.c.b16 %v655, %v654
          %v670 = vpack.c.b16 %v657, %v656
          %v671 = vpack.c.b16 %v659, %v658
          %v672 = vpack.c.b16 %v661, %v660
          %v673 = vpack.c.b16 %v663, %v662
          %v674 = vpack.c.b16 %v665, %v664
          %v675 = vpack.c.b16 %v667, %v666
          %684 = vmatprep.subr.bf16.mxu0 0
          %685 = vmatpush1.bf16.msra.mxu0 %v668
          %686 = vmatprep.subr.bf16.mxu0 0
          %687 = vmatpush1.bf16.msra.mxu0 %v669
          %688 = vmatprep.subr.bf16.mxu0 0
          %689 = vmatpush1.bf16.msra.mxu0 %v670
          %690 = vmatprep.subr.bf16.mxu0 0
          %691 = vmatpush1.bf16.msra.mxu0 %v671
          %692 = vmatprep.subr.bf16.mxu0 0
          %693 = vmatpush1.bf16.msra.mxu0 %v672
          %694 = vmatprep.subr.bf16.mxu0 0
          %695 = vmatpush1.bf16.msra.mxu0 %v673
          %696 = vmatprep.subr.bf16.mxu0 0
          %697 = vmatpush1.bf16.msra.mxu0 %v674
          %698 = vmatprep.subr.bf16.mxu0 0
          %699 = vmatpush1.bf16.msra.mxu0 %v675
          %700 = vmatprep.subr.bf16.mxu0 0
          %701 = vmatpush1.bf16.msra.mxu0 0
          %702 = vmatprep.subr.bf16.mxu0 0
          %703 = vmatpush1.bf16.msra.mxu0 0
          %704 = vmatprep.subr.bf16.mxu0 0
          %705 = vmatpush1.bf16.msra.mxu0 0
          %706 = vmatprep.subr.bf16.mxu0 0
          %707 = vmatpush1.bf16.msra.mxu0 0
          %708 = vmatprep.subr.bf16.mxu0 0
          %709 = vmatpush1.bf16.msra.mxu0 0
          %710 = vmatprep.subr.bf16.mxu0 0
          %711 = vmatpush1.bf16.msra.mxu0 0
          %712 = vmatprep.subr.bf16.mxu0 0
          %713 = vmatpush1.bf16.msra.mxu0 0
          %714 = vmatprep.subr.bf16.mxu0 0
          %715 = vmatpush1.bf16.msra.mxu0 0
          %716 = vmatprep.mubr.bf16.mxu0 0
          %717 = vmatmul.mubr.bf16.gmra.mrb[0].mxu0 %v566
          %v718 = vpop.f32.mrb[0].mxu0
          %v719 = vadd.f32 %v631, %v718
          %v720 = vpop.f32.mrb[0].mxu0
          %v721 = vpop.f32.mrb[0].mxu0
          %v722 = vpop.f32.mrb[0].mxu0
          %723 = vdwg.mxu0
          %v724 = vrot.slane %v719, 4
          %v725 = vadd.f32 %v719, %v724
          %v726 = vrot.slane %v725, 2
          %v727 = vadd.f32 %v725, %v726
          %v728 = vrot.slane %v727, 1
          %v729 = vadd.f32 %v727, %v728
          %v730 = vrcp.pop 8.0
          %v731 = vmul.f32 %v729, %v730
          %v732 = vsub.f32 %v719, %v731
          %v733 = vmul.f32 %v732, %v732
          %v734 = vrot.slane %v733, 4
          %v735 = vadd.f32 %v733, %v734
          %v736 = vrot.slane %v735, 2
          %v737 = vadd.f32 %v735, %v736
          %v738 = vrot.slane %v737, 1
          %v739 = vadd.f32 %v737, %v738
          %v740 = vmul.f32 %v739, %v730
          %v741 = vadd.f32 %v740, 0.001
          %v742 = vrsqrt.pop %v741
          %v743 = vmul.f32 %v742, %v365
          %v744 = vlaneseq
          %v745 = vshrl.u32 %v744, 7
          %v746 = vsub.s32 0, %v745
          %v747 = vrot.slane %v743, %v746
          %v748 = vmul.f32 %v732, %v747
          %v749 = vlaneseq
          %v750 = vshrl.u32 %v749, 7
          %v751 = vsub.s32 0, %v750
          %v752 = vrot.slane %v366, %v751
          %v753 = vadd.f32 %v748, %v752
          %v754 = vmax.f32 %v753, 0.0
          %v755 = vpack.c.bf16 %v754, %v754
          %756 = vst [vmem:[#allocation11] sm:$0xf] %v755
        $region72: #{tpu_custom_call.1} parent=43 // pred_fallthru
          _
        // Predicated region
        $region73: #{tpu_custom_call.1} parent=43 // pred_check
          %p757 = pneg %p183
        $region74: #{tpu_custom_call.1} parent=43 // pred_check_branch
          %759 = sbr.rel (%p757) target = $region76
        $region75: #{tpu_custom_call.1} parent=43 // pred_region
          %s761 = ssub.s32 64, 64
          %762 = vsyncadd [#allocation4], %s761
          %s764 = sshll.u32 [#allocation11], 4
          %s765 = int_to_ptr.vmem [resolvable:$true] %s764
          %767 = dma.vmem_to_hbm [thread:$0]  %s765, 64, %s6, [#allocation4]
        $region76: #{tpu_custom_call.1} parent=43 // pred_fallthru
          _
        // Predicated region
        $region77: #{tpu_custom_call.1} parent=43 // pred_check
          %p768 = pneg %p183
        $region78: #{tpu_custom_call.1} parent=43 // pred_check_branch
          %770 = sbr.rel (%p768) target = $region80
        $region79: #{tpu_custom_call.1} parent=43 // pred_region
          %771 = dma.done [#allocation4], 64
        $region80: #{tpu_custom_call.1} parent=43 // pred_fallthru
          _
      $region44: #{tpu_custom_call.1} parent=5 // pred_fallthru
        _
      %p772 = scmp.le.s32.totalorder 2, %s18
      // Predicated region
      $region81: #{tpu_custom_call.1} parent=5 // pred_check
        %p773 = pneg %p772
      $region82: #{tpu_custom_call.1} parent=5 // pred_check_branch
        %775 = sbr.rel (%p773) target = $region84
      $region83: #{tpu_custom_call.1} parent=5 // pred_region
        %s776 = ssub.s32 %s18, 2
      $region84: #{tpu_custom_call.1} parent=5 // pred_fallthru
        _
    $region6: #{tpu_custom_call.1} parent=1 // loop_footer
      %s22 = sadd.s32 1, %s18
    $region7: #{tpu_custom_call.1} parent=1 // loop_footer_branch
      %17 = sbr.rel target = $region3
    $region8: #{tpu_custom_call.1} parent=1 // loop_exit
      _
    %777 = vsyncpa [#allocation3], 1
    %s778 = scalar_lea.sflag [#allocation3], 1
    %779 = vsyncpa %s778, 1
    %780 = vsyncpa [#allocation6], 1
    %781 = vsyncpa [#allocation9], 1
    %s782 = scalar_lea.sflag [#allocation9], 1
    %783 = vsyncpa %s782, 1
    %784 = vsyncpa [#allocation4], 1
    %s785 = scalar_lea.sflag [#allocation4], 1
    %786 = vsyncpa %s785, 1

</llo_original>
